<compile_context>
chip_gen: v6e
topology: v6e:2x2x1
jax: 0.10.0
libtpu: 0.0.40
codegen_flags: <defaults>
</compile_context>

<pallas_src>
import jax
import jax.numpy as jnp
from jax.experimental import pallas as pl
from jax.experimental.pallas import tpu as pltpu

LANES = 128
# Row offsets inside the packed parameter slab (all 8-sublane aligned).
ROW_W1, ROW_W2, ROW_WH, ROW_WC = 0, 128, 256, 384
ROW_B1, ROW_B2, ROW_BH, ROW_BC = 512, 520, 528, 536
SLAB_ROWS = 544


def actor_critic_kernel(x_ref, p_ref, out_ref):
    x = x_ref[...]  # (N, 128) f32; lanes 0..3 hold the CartPole state, rest zero.

    # F.normalize(x, dim=0): per-column L2 normalization over the batch axis.
    # rsqrt goes to the EUP (free slot); clamping sumsq at 1e-24 == clamping the
    # norm at 1e-12 (PyTorch eps). Zero-padded lanes stay exactly zero.
    sumsq = jnp.sum(x * x, axis=0, keepdims=True)
    xn = x * jax.lax.rsqrt(jnp.maximum(sumsq, 1e-24))

    # Static, aligned slices of the packed parameter slab (free).
    w1 = p_ref[ROW_W1:ROW_W1 + LANES, :]   # l1:   rows 0..3,  cols 0..24
    w2 = p_ref[ROW_W2:ROW_W2 + LANES, :]   # l2:   rows 0..24, cols 0..49
    wh = p_ref[ROW_WH:ROW_WH + LANES, :]   # actor_lin1 (cols 0..1) + l3 (cols 2..26)
    wc = p_ref[ROW_WC:ROW_WC + LANES, :]   # critic_lin1: rows 2..26, col 2
    b1 = p_ref[ROW_B1:ROW_B1 + 1, :]
    b2 = p_ref[ROW_B2:ROW_B2 + 1, :]
    bh = p_ref[ROW_BH:ROW_BH + 1, :]
    bc = p_ref[ROW_BC:ROW_BC + 1, :]

    # y = relu(l1(x)); y = relu(l2(y)).  Padded lanes: relu(0 + 0) == 0.
    y = jnp.maximum(jnp.dot(xn, w1, preferred_element_type=jnp.float32) + b1, 0.0)
    y = jnp.maximum(jnp.dot(y, w2, preferred_element_type=jnp.float32) + b2, 0.0)

    # Fused head matmul: lanes 0..1 = actor logits, lanes 2..26 = l3 pre-activation.
    h = jnp.dot(y, wh, preferred_element_type=jnp.float32) + bh

    # actor = log_softmax(actor_logits, dim=0): softmax over the batch axis, per lane.
    m = jnp.max(h, axis=0, keepdims=True)
    hs = h - m
    logsm = hs - jnp.log(jnp.sum(jnp.exp(hs), axis=0, keepdims=True))

    # critic branch: c = relu(l3(y.detach())) lives in lanes 2..26 of relu(h).
    # wc is zero outside rows 2..26, so actor lanes / pad lanes never contribute.
    c = jnp.maximum(h, 0.0)
    crit = jnp.tanh(jnp.dot(c, wc, preferred_element_type=jnp.float32) + bc)

    # Single lane-dense (N, 128) store: lanes 0..1 actor log-probs, lane 2 critic, rest 0.
    lane = jax.lax.broadcasted_iota(jnp.int32, h.shape, 1)
    out_ref[...] = jnp.where(lane < 2, logsm, crit)


def pack_params(params):
    """Pack all weights/biases into one lane-dense (544, 128) f32 slab.
    Weights are stored transposed vs. PyTorch, i.e. (in_features, out_features)."""
    slab = jnp.zeros((SLAB_ROWS, LANES), jnp.float32)
    slab = slab.at[ROW_W1:ROW_W1 + 4, 0:25].set(params["w1"])
    slab = slab.at[ROW_W2:ROW_W2 + 25, 0:50].set(params["w2"])
    slab = slab.at[ROW_WH:ROW_WH + 50, 0:2].set(params["wa"])
    slab = slab.at[ROW_WH:ROW_WH + 50, 2:27].set(params["w3"])
    slab = slab.at[ROW_WC + 2:ROW_WC + 27, 2:3].set(params["wc"])
    slab = slab.at[ROW_B1, 0:25].set(params["b1"][0])
    slab = slab.at[ROW_B2, 0:50].set(params["b2"][0])
    slab = slab.at[ROW_BH, 0:2].set(params["ba"][0])
    slab = slab.at[ROW_BH, 2:27].set(params["b3"][0])
    slab = slab.at[ROW_BC, 2:3].set(params["bc"][0])
    return slab


@jax.jit
def actor_critic_forward(x, slab):
    """x: (N, 4) float32, slab: (544, 128) packed parameters (see pack_params)."""
    n, f = x.shape
    x_pad = jnp.zeros((n, LANES), jnp.float32).at[:, :f].set(x)
    vmem = pl.BlockSpec(memory_space=pltpu.MemorySpace.VMEM)
    out = pl.pallas_call(
        actor_critic_kernel,
        out_shape=jax.ShapeDtypeStruct((n, LANES), jnp.float32),
        in_specs=[vmem, vmem],
        out_specs=vmem,
    )(x_pad, slab)
    return out[:, 0:2], out[:, 2:3]  # actor log-probs (N,2), critic value (N,1)


def init_params(key):
    """Deterministic PyTorch-style init: U(-1/sqrt(fan_in), 1/sqrt(fan_in)).
    Weights stored as (in_features, out_features)."""
    dims = [("w1", "b1", 4, 25),
            ("w2", "b2", 25, 50),
            ("wa", "ba", 50, 2),
            ("w3", "b3", 50, 25),
            ("wc", "bc", 25, 1)]
    params = {}
    for wname, bname, fan_in, fan_out in dims:
        key, kw, kb = jax.random.split(key, 3)
        bound = 1.0 / jnp.sqrt(float(fan_in))
        params[wname] = jax.random.uniform(
            kw, (fan_in, fan_out), jnp.float32, -bound, bound)
        params[bname] = jax.random.uniform(
            kb, (1, fan_out), jnp.float32, -bound, bound)
    return params


def reference_forward(x, params):
    """Pure-JAX reference mirroring the PyTorch forward semantics."""
    xn = x / jnp.maximum(jnp.sqrt(jnp.sum(x * x, axis=0, keepdims=True)), 1e-12)
    y = jax.nn.relu(xn @ params["w1"] + params["b1"])
    y = jax.nn.relu(y @ params["w2"] + params["b2"])
    actor = jax.nn.log_softmax(y @ params["wa"] + params["ba"], axis=0)
    c = jax.nn.relu(y @ params["w3"] + params["b3"])
    critic = jnp.tanh(c @ params["wc"] + params["bc"])
    return actor, critic


if __name__ == "__main__":
    key = jax.random.PRNGKey(0)
    key, kx = jax.random.split(key)

    N = 8  # small batch (multiple of 8 sublanes); CartPole state dim is 4
    x = jax.random.normal(kx, (N, 4), dtype=jnp.float32)
    params = init_params(key)
    slab = pack_params(params)

    actor, critic = jax.block_until_ready(actor_critic_forward(x, slab))

    actor_ref, critic_ref = reference_forward(x, params)
    assert actor.shape == (N, 2) and critic.shape == (N, 1)
    assert jnp.allclose(actor, actor_ref, atol=1e-5, rtol=1e-5)
    assert jnp.allclose(critic, critic_ref, atol=1e-5, rtol=1e-5)

    print("KERNEL_OK")
</pallas_src>

<mosaic_0001>
module attributes {stable_mosaic.version = 11 : i64} {
  func.func @actor_critic_kernel(%arg0: memref<8x128xf32, #tpu.memory_space<vmem>>, %arg1: memref<544x128xf32, #tpu.memory_space<vmem>>, %arg2: memref<8x128xf32, #tpu.memory_space<vmem>>) attributes {dimension_semantics = [], scalar_prefetch = 0 : i64, scratch_operands = 0 : i64, tpu.core_type = #tpu.core_type<tc>} {
    %c0 = arith.constant 0 : index
    %c0_0 = arith.constant 0 : index
    %0 = vector.load %arg0[%c0, %c0_0] : memref<8x128xf32, #tpu.memory_space<vmem>>, vector<8x128xf32>
    %1 = arith.mulf %0, %0 : vector<8x128xf32>
    %cst = arith.constant dense<0.000000e+00> : vector<128xf32>
    %2 = vector.multi_reduction <add>, %1, %cst [0] : vector<8x128xf32> to vector<128xf32>
    %3 = vector.shape_cast %2 : vector<128xf32> to vector<1x128xf32>
    %cst_1 = arith.constant 1.000000e-24 : f32
    %4 = vector.broadcast %cst_1 : f32 to vector<1x128xf32>
    %5 = arith.maximumf %3, %4 : vector<1x128xf32>
    %6 = math.rsqrt %5 : vector<1x128xf32>
    %7 = vector.broadcast %6 : vector<1x128xf32> to vector<8x128xf32>
    %8 = arith.mulf %0, %7 : vector<8x128xf32>
    %c0_2 = arith.constant 0 : index
    %c0_3 = arith.constant 0 : index
    %9 = vector.load %arg1[%c0_2, %c0_3] : memref<544x128xf32, #tpu.memory_space<vmem>>, vector<128x128xf32>
    %c128 = arith.constant 128 : index
    %c0_4 = arith.constant 0 : index
    %10 = vector.load %arg1[%c128, %c0_4] : memref<544x128xf32, #tpu.memory_space<vmem>>, vector<128x128xf32>
    %c256 = arith.constant 256 : index
    %c0_5 = arith.constant 0 : index
    %11 = vector.load %arg1[%c256, %c0_5] : memref<544x128xf32, #tpu.memory_space<vmem>>, vector<128x128xf32>
    %c384 = arith.constant 384 : index
    %c0_6 = arith.constant 0 : index
    %12 = vector.load %arg1[%c384, %c0_6] : memref<544x128xf32, #tpu.memory_space<vmem>>, vector<128x128xf32>
    %c512 = arith.constant 512 : index
    %c0_7 = arith.constant 0 : index
    %13 = vector.load %arg1[%c512, %c0_7] : memref<544x128xf32, #tpu.memory_space<vmem>>, vector<1x128xf32>
    %c520 = arith.constant 520 : index
    %c0_8 = arith.constant 0 : index
    %14 = vector.load %arg1[%c520, %c0_8] : memref<544x128xf32, #tpu.memory_space<vmem>>, vector<1x128xf32>
    %c528 = arith.constant 528 : index
    %c0_9 = arith.constant 0 : index
    %15 = vector.load %arg1[%c528, %c0_9] : memref<544x128xf32, #tpu.memory_space<vmem>>, vector<1x128xf32>
    %c536 = arith.constant 536 : index
    %c0_10 = arith.constant 0 : index
    %16 = vector.load %arg1[%c536, %c0_10] : memref<544x128xf32, #tpu.memory_space<vmem>>, vector<1x128xf32>
    %cst_11 = arith.constant dense<0.000000e+00> : vector<8x128xf32>
    %17 = tpu.matmul %8, %9, %cst_11 {dimension_numbers = #tpu.dot_dimension_numbers<[1], [0], [0], [1], [0, 0, 1, 1], [], []>} : vector<8x128xf32>, vector<128x128xf32>, vector<8x128xf32> -> vector<8x128xf32>
    %18 = vector.broadcast %13 : vector<1x128xf32> to vector<8x128xf32>
    %19 = arith.addf %17, %18 : vector<8x128xf32>
    %cst_12 = arith.constant 0.000000e+00 : f32
    %20 = vector.broadcast %cst_12 : f32 to vector<8x128xf32>
    %21 = arith.maximumf %19, %20 : vector<8x128xf32>
    %cst_13 = arith.constant dense<0.000000e+00> : vector<8x128xf32>
    %22 = tpu.matmul %21, %10, %cst_13 {dimension_numbers = #tpu.dot_dimension_numbers<[1], [0], [0], [1], [0, 0, 1, 1], [], []>} : vector<8x128xf32>, vector<128x128xf32>, vector<8x128xf32> -> vector<8x128xf32>
    %23 = vector.broadcast %14 : vector<1x128xf32> to vector<8x128xf32>
    %24 = arith.addf %22, %23 : vector<8x128xf32>
    %cst_14 = arith.constant 0.000000e+00 : f32
    %25 = vector.broadcast %cst_14 : f32 to vector<8x128xf32>
    %26 = arith.maximumf %24, %25 : vector<8x128xf32>
    %cst_15 = arith.constant dense<0.000000e+00> : vector<8x128xf32>
    %27 = tpu.matmul %26, %11, %cst_15 {dimension_numbers = #tpu.dot_dimension_numbers<[1], [0], [0], [1], [0, 0, 1, 1], [], []>} : vector<8x128xf32>, vector<128x128xf32>, vector<8x128xf32> -> vector<8x128xf32>
    %28 = vector.broadcast %15 : vector<1x128xf32> to vector<8x128xf32>
    %29 = arith.addf %27, %28 : vector<8x128xf32>
    %cst_16 = arith.constant dense<0xFF800000> : vector<128xf32>
    %30 = vector.multi_reduction <maximumf>, %29, %cst_16 [0] : vector<8x128xf32> to vector<128xf32>
    %31 = vector.shape_cast %30 : vector<128xf32> to vector<1x128xf32>
    %32 = vector.broadcast %31 : vector<1x128xf32> to vector<8x128xf32>
    %33 = arith.subf %29, %32 : vector<8x128xf32>
    %34 = math.exp %33 : vector<8x128xf32>
    %cst_17 = arith.constant dense<0.000000e+00> : vector<128xf32>
    %35 = vector.multi_reduction <add>, %34, %cst_17 [0] : vector<8x128xf32> to vector<128xf32>
    %36 = vector.shape_cast %35 : vector<128xf32> to vector<1x128xf32>
    %37 = math.log %36 : vector<1x128xf32>
    %38 = vector.broadcast %37 : vector<1x128xf32> to vector<8x128xf32>
    %39 = arith.subf %33, %38 : vector<8x128xf32>
    %cst_18 = arith.constant 0.000000e+00 : f32
    %40 = vector.broadcast %cst_18 : f32 to vector<8x128xf32>
    %41 = arith.maximumf %29, %40 : vector<8x128xf32>
    %cst_19 = arith.constant dense<0.000000e+00> : vector<8x128xf32>
    %42 = tpu.matmul %41, %12, %cst_19 {dimension_numbers = #tpu.dot_dimension_numbers<[1], [0], [0], [1], [0, 0, 1, 1], [], []>} : vector<8x128xf32>, vector<128x128xf32>, vector<8x128xf32> -> vector<8x128xf32>
    %43 = vector.broadcast %16 : vector<1x128xf32> to vector<8x128xf32>
    %44 = arith.addf %42, %43 : vector<8x128xf32>
    %45 = math.tanh %44 : vector<8x128xf32>
    %46 = tpu.iota {dimensions = array<i32: 1>} : vector<8x128xi32>
    %c2_i32 = arith.constant 2 : i32
    %47 = vector.broadcast %c2_i32 : i32 to vector<8x128xi32>
    %48 = arith.cmpi slt, %46, %47 : vector<8x128xi32>
    %49 = arith.select %48, %39, %45 : vector<8x128xi1>, vector<8x128xf32>
    %c0_20 = arith.constant 0 : index
    %c0_21 = arith.constant 0 : index
    %50 = vector.load %arg2[%c0_20, %c0_21] : memref<8x128xf32, #tpu.memory_space<vmem>>, vector<8x128xf32>
    tpu.vector_store %arg2[%c0_20, %c0_21], %49 {strides = array<i32>} : memref<8x128xf32, #tpu.memory_space<vmem>>, vector<8x128xf32>,
    return
  }
}

</mosaic_0001>

<llo_original>
// kernel: actor_critic_forward.1
$region0: #{actor_critic_forward.1}
  #allocation0 [shape = 'u32[]', space=smem, size = 0x4, offset = 0x4, fixed_abs, tag = 'smem constant byte address 0x4 - core index']
  #allocation1 [shape = 'u32[144,128]{1,0:T(1,128)}', space=vmem, size = 0x12000, scoped, tag = 'internal scratch']
  %s0 = inlined_call_operand.vmem [shape: f32[8,128], index: 0, kind: input, shape index: {}]
  %s1 = inlined_call_operand.hbm [shape: f32[544,128], index: 1, kind: input, shape index: {}]
  %s2 = inlined_call_operand.vmem [shape: f32[8,128], index: 2, kind: output, shape index: {}]
  %s3 = sld [smem:[#allocation0]]
  $region22: #{actor_critic_forward.1} parent=0
    _
  %s5 = ssub.s32 1, %s3
  %s6 = scalar_select 0, %s5, %s3
  $region1: #{actor_critic_forward.1} parent=0
    #allocation2 [shape = 'u8[278528]{0}', space=vmem, size = 0x44000, scoped, tag = 'input window, operand 1, single buffered']
    #allocation3 [shape = 's32[1]{0}', space=sflag, size = 0x4, scoped, tag = 'scoped memory for actor_critic_forward.1']
    %7 = vsyncpa [#allocation3], 0
    // Predicated region
    $region2: #{actor_critic_forward.1} parent=1 // pred_check
      _
    $region3: #{actor_critic_forward.1} parent=1 // pred_check_branch
      %9 = sbr.rel (0) target = $region5
    $region4: #{actor_critic_forward.1} parent=1 // pred_region
      _
    $region5: #{actor_critic_forward.1} parent=1 // pred_fallthru
      _
    // Predicated region
    $region6: #{actor_critic_forward.1} parent=1 // pred_check
      _
    $region7: #{actor_critic_forward.1} parent=1 // pred_check_branch
      %11 = sbr.rel (0) target = $region9
    $region8: #{actor_critic_forward.1} parent=1 // pred_region
      %s13 = ssub.s32 8704, 8704
      %14 = vsyncadd [#allocation3], %s13
      %s15 = sshll.u32 [#allocation2], 4
      %s16 = int_to_ptr.vmem [resolvable:$true] %s15
      %21 = dma.hbm_to_vmem [thread:$0]  %s1, 8704, %s16, [#allocation3], 128, 128, 8
    $region9: #{actor_critic_forward.1} parent=1 // pred_fallthru
      _
    // Predicated region
    $region10: #{actor_critic_forward.1} parent=1 // pred_check
      _
    $region11: #{actor_critic_forward.1} parent=1 // pred_check_branch
      %23 = sbr.rel (0) target = $region13
    $region12: #{actor_critic_forward.1} parent=1 // pred_region
      %24 = dma.done [#allocation3], 8704
    $region13: #{actor_critic_forward.1} parent=1 // pred_fallthru
      _
    %v25 = vld [vmem:[%s0] sm:$0xff]
    %v26 = vmul.f32 %v25, %v25
    %v27 = vrot.slane %v26, 4
    %v28 = vadd.f32 %v26, %v27
    %v29 = vrot.slane %v28, 2
    %v30 = vadd.f32 %v28, %v29
    %v31 = vrot.slane %v30, 1
    %v32 = vadd.f32 %v30, %v31
    %v33 = vmax.f32 %v32, 1e-24
    %v34 = vrsqrt.pop %v33
    %v35 = vmul.f32 %v25, %v34
    %v36 = vld [vmem:[#allocation2] sm:$0xff]
    %v37 = vld [vmem:[#allocation2 + $0x8] sm:$0xff]
    %v38 = vld [vmem:[#allocation2 + $0x10] sm:$0xff]
    %v39 = vld [vmem:[#allocation2 + $0x18] sm:$0xff]
    %v40 = vld [vmem:[#allocation2 + $0x20] sm:$0xff]
    %v41 = vld [vmem:[#allocation2 + $0x28] sm:$0xff]
    %v42 = vld [vmem:[#allocation2 + $0x30] sm:$0xff]
    %v43 = vld [vmem:[#allocation2 + $0x38] sm:$0xff]
    %v44 = vld [vmem:[#allocation2 + $0x40] sm:$0xff]
    %v45 = vld [vmem:[#allocation2 + $0x48] sm:$0xff]
    %v46 = vld [vmem:[#allocation2 + $0x50] sm:$0xff]
    %v47 = vld [vmem:[#allocation2 + $0x58] sm:$0xff]
    %v48 = vld [vmem:[#allocation2 + $0x60] sm:$0xff]
    %v49 = vld [vmem:[#allocation2 + $0x68] sm:$0xff]
    %v50 = vld [vmem:[#allocation2 + $0x70] sm:$0xff]
    %v51 = vld [vmem:[#allocation2 + $0x78] sm:$0xff]
    %v52 = vld [vmem:[#allocation2 + $0x80] sm:$0xff]
    %v53 = vld [vmem:[#allocation2 + $0x88] sm:$0xff]
    %v54 = vld [vmem:[#allocation2 + $0x90] sm:$0xff]
    %v55 = vld [vmem:[#allocation2 + $0x98] sm:$0xff]
    %v56 = vld [vmem:[#allocation2 + $0xa0] sm:$0xff]
    %v57 = vld [vmem:[#allocation2 + $0xa8] sm:$0xff]
    %v58 = vld [vmem:[#allocation2 + $0xb0] sm:$0xff]
    %v59 = vld [vmem:[#allocation2 + $0xb8] sm:$0xff]
    %v60 = vld [vmem:[#allocation2 + $0xc0] sm:$0xff]
    %v61 = vld [vmem:[#allocation2 + $0xc8] sm:$0xff]
    %v62 = vld [vmem:[#allocation2 + $0xd0] sm:$0xff]
    %v63 = vld [vmem:[#allocation2 + $0xd8] sm:$0xff]
    %v64 = vld [vmem:[#allocation2 + $0xe0] sm:$0xff]
    %v65 = vld [vmem:[#allocation2 + $0xe8] sm:$0xff]
    %v66 = vld [vmem:[#allocation2 + $0xf0] sm:$0xff]
    %v67 = vld [vmem:[#allocation2 + $0xf8] sm:$0xff]
    %v68 = vld [vmem:[#allocation2 + $0x100] sm:$0xff]
    %v69 = vld [vmem:[#allocation2 + $0x108] sm:$0xff]
    %v70 = vld [vmem:[#allocation2 + $0x110] sm:$0xff]
    %v71 = vld [vmem:[#allocation2 + $0x118] sm:$0xff]
    %v72 = vld [vmem:[#allocation2 + $0x120] sm:$0xff]
    %v73 = vld [vmem:[#allocation2 + $0x128] sm:$0xff]
    %v74 = vld [vmem:[#allocation2 + $0x130] sm:$0xff]
    %v75 = vld [vmem:[#allocation2 + $0x138] sm:$0xff]
    %v76 = vld [vmem:[#allocation2 + $0x140] sm:$0xff]
    %v77 = vld [vmem:[#allocation2 + $0x148] sm:$0xff]
    %v78 = vld [vmem:[#allocation2 + $0x150] sm:$0xff]
    %v79 = vld [vmem:[#allocation2 + $0x158] sm:$0xff]
    %v80 = vld [vmem:[#allocation2 + $0x160] sm:$0xff]
    %v81 = vld [vmem:[#allocation2 + $0x168] sm:$0xff]
    %v82 = vld [vmem:[#allocation2 + $0x170] sm:$0xff]
    %v83 = vld [vmem:[#allocation2 + $0x178] sm:$0xff]
    %v84 = vld [vmem:[#allocation2 + $0x180] sm:$0xff]
    %v85 = vld [vmem:[#allocation2 + $0x188] sm:$0xff]
    %v86 = vld [vmem:[#allocation2 + $0x190] sm:$0xff]
    %v87 = vld [vmem:[#allocation2 + $0x198] sm:$0xff]
    %v88 = vld [vmem:[#allocation2 + $0x1a0] sm:$0xff]
    %v89 = vld [vmem:[#allocation2 + $0x1a8] sm:$0xff]
    %v90 = vld [vmem:[#allocation2 + $0x1b0] sm:$0xff]
    %v91 = vld [vmem:[#allocation2 + $0x1b8] sm:$0xff]
    %v92 = vld [vmem:[#allocation2 + $0x1c0] sm:$0xff]
    %v93 = vld [vmem:[#allocation2 + $0x1c8] sm:$0xff]
    %v94 = vld [vmem:[#allocation2 + $0x1d0] sm:$0xff]
    %v95 = vld [vmem:[#allocation2 + $0x1d8] sm:$0xff]
    %v96 = vld [vmem:[#allocation2 + $0x1e0] sm:$0xff]
    %v97 = vld [vmem:[#allocation2 + $0x1e8] sm:$0xff]
    %v98 = vld [vmem:[#allocation2 + $0x1f0] sm:$0xff]
    %v99 = vld [vmem:[#allocation2 + $0x1f8] sm:$0xff]
    %v100 = vld [vmem:[#allocation2 + $0x200] sm:$0x1]
    %v101 = vld [vmem:[#allocation2 + $0x208] sm:$0x1]
    %v102 = vld [vmem:[#allocation2 + $0x210] sm:$0x1]
    %v103 = vld [vmem:[#allocation2 + $0x218] sm:$0x1]
    %v104 = vlaneseq
    %v105 = vshrl.u32 %v104, 7
    %v106 = vsub.s32 0, %v105
    %v107 = vrot.slane %v100, %v106
    %108 = vmatprep.subr.mxu0 0.0
    %109 = vmatpush1.msra.mxu0 %v51
    %110 = vmatprep.subr.mxu0 0.0
    %111 = vmatpush1.msra.mxu0 %v50
    %112 = vmatprep.subr.mxu0 0.0
    %113 = vmatpush1.msra.mxu0 %v49
    %114 = vmatprep.subr.mxu0 0.0
    %115 = vmatpush1.msra.mxu0 %v48
    %116 = vmatprep.subr.mxu0 0.0
    %117 = vmatpush1.msra.mxu0 %v47
    %118 = vmatprep.subr.mxu0 0.0
    %119 = vmatpush1.msra.mxu0 %v46
    %120 = vmatprep.subr.mxu0 0.0
    %121 = vmatpush1.msra.mxu0 %v45
    %122 = vmatprep.subr.mxu0 0.0
    %123 = vmatpush1.msra.mxu0 %v44
    %124 = vmatprep.subr.mxu0 0.0
    %125 = vmatpush1.msra.mxu0 %v43
    %126 = vmatprep.subr.mxu0 0.0
    %127 = vmatpush1.msra.mxu0 %v42
    %128 = vmatprep.subr.mxu0 0.0
    %129 = vmatpush1.msra.mxu0 %v41
    %130 = vmatprep.subr.mxu0 0.0
    %131 = vmatpush1.msra.mxu0 %v40
    %132 = vmatprep.subr.mxu0 0.0
    %133 = vmatpush1.msra.mxu0 %v39
    %134 = vmatprep.subr.mxu0 0.0
    %135 = vmatpush1.msra.mxu0 %v38
    %136 = vmatprep.subr.mxu0 0.0
    %137 = vmatpush1.msra.mxu0 %v37
    %138 = vmatprep.subr.mxu0 0.0
    %139 = vmatpush1.msra.mxu0 %v36
    %140 = vmatprep.subr.mxu0 0.0
    %141 = vmatpush2.msra.mxu0 0.0
    %142 = vmatprep.subr.mxu0 0.0
    %143 = vmatpush2.msra.mxu0 0.0
    %144 = vmatprep.subr.mxu0 0.0
    %145 = vmatpush2.msra.mxu0 0.0
    %146 = vmatprep.subr.mxu0 0.0
    %147 = vmatpush2.msra.mxu0 0.0
    %148 = vmatprep.subr.mxu0 0.0
    %149 = vmatpush2.msra.mxu0 0.0
    %150 = vmatprep.subr.mxu0 0.0
    %151 = vmatpush2.msra.mxu0 0.0
    %152 = vmatprep.subr.mxu0 0.0
    %153 = vmatpush2.msra.mxu0 0.0
    %154 = vmatprep.subr.mxu0 0.0
    %155 = vmatpush2.msra.mxu0 0.0
    %156 = vmatprep.subr.mxu0 0.0
    %157 = vmatpush2.msra.mxu0 0.0
    %158 = vmatprep.subr.mxu0 0.0
    %159 = vmatpush2.msra.mxu0 0.0
    %160 = vmatprep.subr.mxu0 0.0
    %161 = vmatpush2.msra.mxu0 0.0
    %162 = vmatprep.subr.mxu0 0.0
    %163 = vmatpush2.msra.mxu0 0.0
    %164 = vmatprep.subr.mxu0 0.0
    %165 = vmatpush2.msra.mxu0 0.0
    %166 = vmatprep.subr.mxu0 0.0
    %167 = vmatpush2.msra.mxu0 0.0
    %168 = vmatprep.subr.mxu0 0.0
    %169 = vmatpush2.msra.mxu0 0.0
    %170 = vmatprep.subr.mxu0 0.0
    %171 = vmatpush2.msra.mxu0 0.0
    %172 = vmatprep.mubr.f32.mxu0 0.0
    %173 = vmatmul.mubr.f32.gmra.mxu0 %v35
    %v174 = vpop.f32.mrf.mxu0
    %v175 = vadd.f32 %v107, %v174
    %v176 = vpop.f32.mrf.mxu0
    %177 = vdwg.mxu0
    %v178 = vmax.f32 %v175, 0.0
    %v179 = vlaneseq
    %v180 = vshrl.u32 %v179, 7
    %v181 = vsub.s32 0, %v180
    %v182 = vrot.slane %v101, %v181
    %183 = vmatprep.subr.mxu0 0.0
    %184 = vmatpush1.msra.mxu0 %v67
    %185 = vmatprep.subr.mxu0 0.0
    %186 = vmatpush1.msra.mxu0 %v66
    %187 = vmatprep.subr.mxu0 0.0
    %188 = vmatpush1.msra.mxu0 %v65
    %189 = vmatprep.subr.mxu0 0.0
    %190 = vmatpush1.msra.mxu0 %v64
    %191 = vmatprep.subr.mxu0 0.0
    %192 = vmatpush1.msra.mxu0 %v63
    %193 = vmatprep.subr.mxu0 0.0
    %194 = vmatpush1.msra.mxu0 %v62
    %195 = vmatprep.subr.mxu0 0.0
    %196 = vmatpush1.msra.mxu0 %v61
    %197 = vmatprep.subr.mxu0 0.0
    %198 = vmatpush1.msra.mxu0 %v60
    %199 = vmatprep.subr.mxu0 0.0
    %200 = vmatpush1.msra.mxu0 %v59
    %201 = vmatprep.subr.mxu0 0.0
    %202 = vmatpush1.msra.mxu0 %v58
    %203 = vmatprep.subr.mxu0 0.0
    %204 = vmatpush1.msra.mxu0 %v57
    %205 = vmatprep.subr.mxu0 0.0
    %206 = vmatpush1.msra.mxu0 %v56
    %207 = vmatprep.subr.mxu0 0.0
    %208 = vmatpush1.msra.mxu0 %v55
    %209 = vmatprep.subr.mxu0 0.0
    %210 = vmatpush1.msra.mxu0 %v54
    %211 = vmatprep.subr.mxu0 0.0
    %212 = vmatpush1.msra.mxu0 %v53
    %213 = vmatprep.subr.mxu0 0.0
    %214 = vmatpush1.msra.mxu0 %v52
    %215 = vmatprep.subr.mxu0 0.0
    %216 = vmatpush2.msra.mxu0 0.0
    %217 = vmatprep.subr.mxu0 0.0
    %218 = vmatpush2.msra.mxu0 0.0
    %219 = vmatprep.subr.mxu0 0.0
    %220 = vmatpush2.msra.mxu0 0.0
    %221 = vmatprep.subr.mxu0 0.0
    %222 = vmatpush2.msra.mxu0 0.0
    %223 = vmatprep.subr.mxu0 0.0
    %224 = vmatpush2.msra.mxu0 0.0
    %225 = vmatprep.subr.mxu0 0.0
    %226 = vmatpush2.msra.mxu0 0.0
    %227 = vmatprep.subr.mxu0 0.0
    %228 = vmatpush2.msra.mxu0 0.0
    %229 = vmatprep.subr.mxu0 0.0
    %230 = vmatpush2.msra.mxu0 0.0
    %231 = vmatprep.subr.mxu0 0.0
    %232 = vmatpush2.msra.mxu0 0.0
    %233 = vmatprep.subr.mxu0 0.0
    %234 = vmatpush2.msra.mxu0 0.0
    %235 = vmatprep.subr.mxu0 0.0
    %236 = vmatpush2.msra.mxu0 0.0
    %237 = vmatprep.subr.mxu0 0.0
    %238 = vmatpush2.msra.mxu0 0.0
    %239 = vmatprep.subr.mxu0 0.0
    %240 = vmatpush2.msra.mxu0 0.0
    %241 = vmatprep.subr.mxu0 0.0
    %242 = vmatpush2.msra.mxu0 0.0
    %243 = vmatprep.subr.mxu0 0.0
    %244 = vmatpush2.msra.mxu0 0.0
    %245 = vmatprep.subr.mxu0 0.0
    %246 = vmatpush2.msra.mxu0 0.0
    %247 = vmatprep.mubr.f32.mxu0 0.0
    %248 = vmatmul.mubr.f32.gmra.mxu0 %v178
    %v249 = vpop.f32.mrf.mxu0
    %v250 = vadd.f32 %v182, %v249
    %v251 = vpop.f32.mrf.mxu0
    %252 = vdwg.mxu0
    %v253 = vmax.f32 %v250, 0.0
    %v254 = vlaneseq
    %v255 = vshrl.u32 %v254, 7
    %v256 = vsub.s32 0, %v255
    %v257 = vrot.slane %v102, %v256
    %258 = vmatprep.subr.mxu0 0.0
    %259 = vmatpush1.msra.mxu0 %v83
    %260 = vmatprep.subr.mxu0 0.0
    %261 = vmatpush1.msra.mxu0 %v82
    %262 = vmatprep.subr.mxu0 0.0
    %263 = vmatpush1.msra.mxu0 %v81
    %264 = vmatprep.subr.mxu0 0.0
    %265 = vmatpush1.msra.mxu0 %v80
    %266 = vmatprep.subr.mxu0 0.0
    %267 = vmatpush1.msra.mxu0 %v79
    %268 = vmatprep.subr.mxu0 0.0
    %269 = vmatpush1.msra.mxu0 %v78
    %270 = vmatprep.subr.mxu0 0.0
    %271 = vmatpush1.msra.mxu0 %v77
    %272 = vmatprep.subr.mxu0 0.0
    %273 = vmatpush1.msra.mxu0 %v76
    %274 = vmatprep.subr.mxu0 0.0
    %275 = vmatpush1.msra.mxu0 %v75
    %276 = vmatprep.subr.mxu0 0.0
    %277 = vmatpush1.msra.mxu0 %v74
    %278 = vmatprep.subr.mxu0 0.0
    %279 = vmatpush1.msra.mxu0 %v73
    %280 = vmatprep.subr.mxu0 0.0
    %281 = vmatpush1.msra.mxu0 %v72
    %282 = vmatprep.subr.mxu0 0.0
    %283 = vmatpush1.msra.mxu0 %v71
    %284 = vmatprep.subr.mxu0 0.0
    %285 = vmatpush1.msra.mxu0 %v70
    %286 = vmatprep.subr.mxu0 0.0
    %287 = vmatpush1.msra.mxu0 %v69
    %288 = vmatprep.subr.mxu0 0.0
    %289 = vmatpush1.msra.mxu0 %v68
    %290 = vmatprep.subr.mxu0 0.0
    %291 = vmatpush2.msra.mxu0 0.0
    %292 = vmatprep.subr.mxu0 0.0
    %293 = vmatpush2.msra.mxu0 0.0
    %294 = vmatprep.subr.mxu0 0.0
    %295 = vmatpush2.msra.mxu0 0.0
    %296 = vmatprep.subr.mxu0 0.0
    %297 = vmatpush2.msra.mxu0 0.0
    %298 = vmatprep.subr.mxu0 0.0
    %299 = vmatpush2.msra.mxu0 0.0
    %300 = vmatprep.subr.mxu0 0.0
    %301 = vmatpush2.msra.mxu0 0.0
    %302 = vmatprep.subr.mxu0 0.0
    %303 = vmatpush2.msra.mxu0 0.0
    %304 = vmatprep.subr.mxu0 0.0
    %305 = vmatpush2.msra.mxu0 0.0
    %306 = vmatprep.subr.mxu0 0.0
    %307 = vmatpush2.msra.mxu0 0.0
    %308 = vmatprep.subr.mxu0 0.0
    %309 = vmatpush2.msra.mxu0 0.0
    %310 = vmatprep.subr.mxu0 0.0
    %311 = vmatpush2.msra.mxu0 0.0
    %312 = vmatprep.subr.mxu0 0.0
    %313 = vmatpush2.msra.mxu0 0.0
    %314 = vmatprep.subr.mxu0 0.0
    %315 = vmatpush2.msra.mxu0 0.0
    %316 = vmatprep.subr.mxu0 0.0
    %317 = vmatpush2.msra.mxu0 0.0
    %318 = vmatprep.subr.mxu0 0.0
    %319 = vmatpush2.msra.mxu0 0.0
    %320 = vmatprep.subr.mxu0 0.0
    %321 = vmatpush2.msra.mxu0 0.0
    %322 = vmatprep.mubr.f32.mxu0 0.0
    %323 = vmatmul.mubr.f32.gmra.mxu0 %v253
    %v324 = vpop.f32.mrf.mxu0
    %v325 = vadd.f32 %v257, %v324
    %v326 = vpop.f32.mrf.mxu0
    %327 = vdwg.mxu0
    %v328 = vrot.slane %v325, 4
    %v329 = vmax.f32 %v325, %v328
    %v330 = vrot.slane %v329, 2
    %v331 = vmax.f32 %v329, %v330
    %v332 = vrot.slane %v331, 1
    %v333 = vmax.f32 %v331, %v332
    %v334 = vsub.f32 %v325, %v333
    %v335 = vmul.f32 %v334, 1.442695
    %v336 = vpow.pop %v335
    %v337 = vrot.slane %v336, 4
    %v338 = vadd.f32 %v336, %v337
    %v339 = vrot.slane %v338, 2
    %v340 = vadd.f32 %v338, %v339
    %v341 = vrot.slane %v340, 1
    %v342 = vadd.f32 %v340, %v341
    %v343 = vlog2.pop %v342
    %v344 = vmul.f32 %v343, 0.6931472
    %v345 = vsub.f32 %v334, %v344
    %v346 = vmax.f32 %v325, 0.0
    %v347 = vlaneseq
    %v348 = vshrl.u32 %v347, 7
    %v349 = vsub.s32 0, %v348
    %v350 = vrot.slane %v103, %v349
    %351 = vmatprep.subr.mxu0 0.0
    %352 = vmatpush1.msra.mxu0 %v99
    %353 = vmatprep.subr.mxu0 0.0
    %354 = vmatpush1.msra.mxu0 %v98
    %355 = vmatprep.subr.mxu0 0.0
    %356 = vmatpush1.msra.mxu0 %v97
    %357 = vmatprep.subr.mxu0 0.0
    %358 = vmatpush1.msra.mxu0 %v96
    %359 = vmatprep.subr.mxu0 0.0
    %360 = vmatpush1.msra.mxu0 %v95
    %361 = vmatprep.subr.mxu0 0.0
    %362 = vmatpush1.msra.mxu0 %v94
    %363 = vmatprep.subr.mxu0 0.0
    %364 = vmatpush1.msra.mxu0 %v93
    %365 = vmatprep.subr.mxu0 0.0
    %366 = vmatpush1.msra.mxu0 %v92
    %367 = vmatprep.subr.mxu0 0.0
    %368 = vmatpush1.msra.mxu0 %v91
    %369 = vmatprep.subr.mxu0 0.0
    %370 = vmatpush1.msra.mxu0 %v90
    %371 = vmatprep.subr.mxu0 0.0
    %372 = vmatpush1.msra.mxu0 %v89
    %373 = vmatprep.subr.mxu0 0.0
    %374 = vmatpush1.msra.mxu0 %v88
    %375 = vmatprep.subr.mxu0 0.0
    %376 = vmatpush1.msra.mxu0 %v87
    %377 = vmatprep.subr.mxu0 0.0
    %378 = vmatpush1.msra.mxu0 %v86
    %379 = vmatprep.subr.mxu0 0.0
    %380 = vmatpush1.msra.mxu0 %v85
    %381 = vmatprep.subr.mxu0 0.0
    %382 = vmatpush1.msra.mxu0 %v84
    %383 = vmatprep.subr.mxu0 0.0
    %384 = vmatpush2.msra.mxu0 0.0
    %385 = vmatprep.subr.mxu0 0.0
    %386 = vmatpush2.msra.mxu0 0.0
    %387 = vmatprep.subr.mxu0 0.0
    %388 = vmatpush2.msra.mxu0 0.0
    %389 = vmatprep.subr.mxu0 0.0
    %390 = vmatpush2.msra.mxu0 0.0
    %391 = vmatprep.subr.mxu0 0.0
    %392 = vmatpush2.msra.mxu0 0.0
    %393 = vmatprep.subr.mxu0 0.0
    %394 = vmatpush2.msra.mxu0 0.0
    %395 = vmatprep.subr.mxu0 0.0
    %396 = vmatpush2.msra.mxu0 0.0
    %397 = vmatprep.subr.mxu0 0.0
    %398 = vmatpush2.msra.mxu0 0.0
    %399 = vmatprep.subr.mxu0 0.0
    %400 = vmatpush2.msra.mxu0 0.0
    %401 = vmatprep.subr.mxu0 0.0
    %402 = vmatpush2.msra.mxu0 0.0
    %403 = vmatprep.subr.mxu0 0.0
    %404 = vmatpush2.msra.mxu0 0.0
    %405 = vmatprep.subr.mxu0 0.0
    %406 = vmatpush2.msra.mxu0 0.0
    %407 = vmatprep.subr.mxu0 0.0
    %408 = vmatpush2.msra.mxu0 0.0
    %409 = vmatprep.subr.mxu0 0.0
    %410 = vmatpush2.msra.mxu0 0.0
    %411 = vmatprep.subr.mxu0 0.0
    %412 = vmatpush2.msra.mxu0 0.0
    %413 = vmatprep.subr.mxu0 0.0
    %414 = vmatpush2.msra.mxu0 0.0
    %415 = vmatprep.mubr.f32.mxu0 0.0
    %416 = vmatmul.mubr.f32.gmra.mxu0 %v346
    %v417 = vpop.f32.mrf.mxu0
    %v418 = vadd.f32 %v350, %v417
    %v419 = vpop.f32.mrf.mxu0
    %420 = vdwg.mxu0
    %v421 = vtanh.pop %v418
    %v422 = vlaneseq
    %v423 = vand.u32 %v422, 127
    %vm424 = vcmp.lt.s32.totalorder %v423, 2
    %v425 = vsel %vm424, %v345, %v421
    %426 = vst [vmem:[%s2] sm:$0xff] %v425
    // Predicated region
    $region14: #{actor_critic_forward.1} parent=1 // pred_check
      _
    $region15: #{actor_critic_forward.1} parent=1 // pred_check_branch
      %428 = sbr.rel (0) target = $region17
    $region16: #{actor_critic_forward.1} parent=1 // pred_region
      _
    $region17: #{actor_critic_forward.1} parent=1 // pred_fallthru
      _
    // Predicated region
    $region18: #{actor_critic_forward.1} parent=1 // pred_check
      _
    $region19: #{actor_critic_forward.1} parent=1 // pred_check_branch
      %430 = sbr.rel (0) target = $region21
    $region20: #{actor_critic_forward.1} parent=1 // pred_region
      _
    $region21: #{actor_critic_forward.1} parent=1 // pred_fallthru
      _
    %431 = vsyncpa [#allocation3], 1

</llo_original>
